<compile_context>
chip_gen: v6e
topology: v6e:2x2x1
jax: 0.10.0
libtpu: 0.0.40
codegen_flags: <defaults>
</compile_context>

<pallas_src>
import functools

import jax
import jax.numpy as jnp
from jax.experimental import pallas as pl
from jax.experimental.pallas import tpu as pltpu


# ----------------------------------------------------------------------------
# Fused attention kernel (one batch element per grid step)
# ----------------------------------------------------------------------------
def _tnt_attention_kernel(x_ref, wqkv_ref, bqkv_ref, wo_ref, bo_ref, o_ref, *,
                          n_heads, head_dim):
    """Block shapes:
      x_ref    : (1, N, D)
      wqkv_ref : (D, 3*inner)      inner = n_heads * head_dim, columns = [Wq | Wk | Wv]
      bqkv_ref : (1, 3*inner)
      wo_ref   : (inner, D)
      bo_ref   : (1, D)
      o_ref    : (1, N, D)
    """
    inner = n_heads * head_dim
    inv_scale = 1.0 / (float(head_dim) ** 0.5)   # reference: qk_dot / head_dim ** 0.5

    x = x_ref[0].astype(jnp.float32)                                    # (N, D)

    # --- fused QKV projection: single lane-dense (N, 3*inner) MXU matmul ---
    qkv = jnp.dot(x, wqkv_ref[...], preferred_element_type=jnp.float32)
    qkv = qkv + bqkv_ref[...]                                           # (N, 3*inner)

    # --- per-head softmax attention (static unrolled loop; all in vregs) ---
    head_outs = []
    for h in range(n_heads):
        lo = h * head_dim
        q_h = qkv[:, lo:lo + head_dim] * inv_scale                      # (N, Dh)
        k_h = qkv[:, inner + lo:inner + lo + head_dim]                  # (N, Dh)
        v_h = qkv[:, 2 * inner + lo:2 * inner + lo + head_dim]          # (N, Dh)

        # s[i, j] = <q_i, k_j>   (1/sqrt(Dh) already folded into q)
        s = jax.lax.dot_general(q_h, k_h, (((1,), (1,)), ((), ())),
                                preferred_element_type=jnp.float32)     # (N, N)
        s = s - jnp.max(s, axis=-1, keepdims=True)
        p = jnp.exp(s)
        p = p * pl.reciprocal(jnp.sum(p, axis=-1, keepdims=True), approx=True)
        head_outs.append(jnp.dot(p, v_h, preferred_element_type=jnp.float32))

    # '(b h) n d -> b n (h d)': merge heads back onto the lane axis.
    merged = jnp.concatenate(head_outs, axis=-1)                        # (N, inner)

    # --- output projection ---
    out = jnp.dot(merged, wo_ref[...], preferred_element_type=jnp.float32)
    out = out + bo_ref[...]
    o_ref[0] = out.astype(o_ref.dtype)


def tnt_attention(x, wq, bq, wk, bk, wv, bv, wo, bo, *, n_heads, head_dim):
    """tnt_Attention.forward.  x: (B, N, emb_dim); weights stored as (in, out)."""
    B, N, D = x.shape
    inner = n_heads * head_dim
    assert wq.shape == (D, inner) and wk.shape == (D, inner) and wv.shape == (D, inner)
    assert wo.shape == (inner, D)

    # One-time fusion of the three projection weights/biases: [q | k | v].
    wqkv = jnp.concatenate([wq, wk, wv], axis=1)                        # (D, 3*inner)
    bqkv = jnp.concatenate([bq, bk, bv], axis=0).reshape(1, 3 * inner)

    return pl.pallas_call(
        functools.partial(_tnt_attention_kernel,
                          n_heads=n_heads, head_dim=head_dim),
        out_shape=jax.ShapeDtypeStruct((B, N, D), x.dtype),
        grid=(B,),
        in_specs=[
            pl.BlockSpec((1, N, D), lambda b: (b, 0, 0)),
            pl.BlockSpec((D, 3 * inner), lambda b: (0, 0)),
            pl.BlockSpec((1, 3 * inner), lambda b: (0, 0)),
            pl.BlockSpec((inner, D), lambda b: (0, 0)),
            pl.BlockSpec((1, D), lambda b: (0, 0)),
        ],
        out_specs=pl.BlockSpec((1, N, D), lambda b: (b, 0, 0)),
        compiler_params=pltpu.CompilerParams(
            dimension_semantics=("parallel",)),   # both TCs on v7x; no-op on v5e/v6e
    )(x, wqkv, bqkv, wo, bo.reshape(1, D))


# ----------------------------------------------------------------------------
# Pure-JAX reference (mirrors the PyTorch module) for a numerical sanity check
# ----------------------------------------------------------------------------
def tnt_attention_ref(x, wq, bq, wk, bk, wv, bv, wo, bo, *, n_heads, head_dim):
    b, n, _ = x.shape
    scale = float(head_dim) ** 0.5

    def split(t):   # 'b n (h d) -> (b h) n d'
        return t.reshape(b, n, n_heads, head_dim).transpose(0, 2, 1, 3).reshape(
            b * n_heads, n, head_dim)

    q = split(x @ wq + bq)
    k = split(x @ wk + bk)
    v = split(x @ wv + bv)
    s = jnp.einsum('bid,bjd->bij', q, k) / scale
    p = jax.nn.softmax(s, axis=-1)
    o = jnp.einsum('bij,bjd->bid', p, v)
    o = o.reshape(b, n_heads, n, head_dim).transpose(0, 2, 1, 3).reshape(
        b, n, n_heads * head_dim)
    return o @ wo + bo


# ----------------------------------------------------------------------------
if __name__ == "__main__":
    # Small shapes consistent with the module: x is (B, N, emb_dim) tokens.
    # Dims chosen so every slice offset and output slab is 128-lane aligned.
    B, N = 2, 8
    emb_dim, n_heads, head_dim = 256, 2, 128
    inner = n_heads * head_dim

    key = jax.random.PRNGKey(0)
    ks = jax.random.split(key, 9)
    x = jax.random.normal(ks[0], (B, N, emb_dim), jnp.float32)
    wq = jax.random.normal(ks[1], (emb_dim, inner), jnp.float32) * 0.02
    bq = jax.random.normal(ks[2], (inner,), jnp.float32) * 0.02
    wk = jax.random.normal(ks[3], (emb_dim, inner), jnp.float32) * 0.02
    bk = jax.random.normal(ks[4], (inner,), jnp.float32) * 0.02
    wv = jax.random.normal(ks[5], (emb_dim, inner), jnp.float32) * 0.02
    bv = jax.random.normal(ks[6], (inner,), jnp.float32) * 0.02
    wo = jax.random.normal(ks[7], (inner, emb_dim), jnp.float32) * 0.02
    bo = jax.random.normal(ks[8], (emb_dim,), jnp.float32) * 0.02

    fwd = jax.jit(functools.partial(tnt_attention,
                                    n_heads=n_heads, head_dim=head_dim))
    out = fwd(x, wq, bq, wk, bk, wv, bv, wo, bo)
    jax.block_until_ready(out)
    assert out.shape == (B, N, emb_dim)

    ref = tnt_attention_ref(x, wq, bq, wk, bk, wv, bv, wo, bo,
                            n_heads=n_heads, head_dim=head_dim)
    max_err = float(jnp.max(jnp.abs(out - ref)))
    assert jnp.allclose(out, ref, atol=1e-2, rtol=1e-2), max_err

    print("KERNEL_OK")
</pallas_src>

<mosaic_0001>
module attributes {stable_mosaic.version = 11 : i64} {
  func.func @_tnt_attention_kernel(%arg0: i32, %arg1: memref<1x8x256xf32, #tpu.memory_space<vmem>>, %arg2: memref<256x768xf32, #tpu.memory_space<vmem>>, %arg3: memref<1x768xf32, #tpu.memory_space<vmem>>, %arg4: memref<256x256xf32, #tpu.memory_space<vmem>>, %arg5: memref<1x256xf32, #tpu.memory_space<vmem>>, %arg6: memref<1x8x256xf32, #tpu.memory_space<vmem>>) attributes {dimension_semantics = [#tpu.dimension_semantics<parallel>], iteration_bounds = array<i64: 2>, scalar_prefetch = 0 : i64, scratch_operands = 0 : i64, tpu.core_type = #tpu.core_type<tc>, window_params = [{transform_indices = @transform_0, window_bounds = array<i64: 1, 8, 256>}, {pipeline_mode = #tpu.pipeline_mode<synchronous>, transform_indices = @transform_1, window_bounds = array<i64: 256, 768>}, {pipeline_mode = #tpu.pipeline_mode<synchronous>, transform_indices = @transform_2, window_bounds = array<i64: 1, 768>}, {pipeline_mode = #tpu.pipeline_mode<synchronous>, transform_indices = @transform_3, window_bounds = array<i64: 256, 256>}, {pipeline_mode = #tpu.pipeline_mode<synchronous>, transform_indices = @transform_4, window_bounds = array<i64: 1, 256>}, {transform_indices = @transform_5, window_bounds = array<i64: 1, 8, 256>}]} {
    %c0 = arith.constant 0 : index
    %c0_0 = arith.constant 0 : index
    %c0_1 = arith.constant 0 : index
    %0 = vector.load %arg1[%c0, %c0_0, %c0_1] : memref<1x8x256xf32, #tpu.memory_space<vmem>>, vector<1x8x256xf32>
    %1 = vector.shape_cast %0 : vector<1x8x256xf32> to vector<8x256xf32>
    %c0_2 = arith.constant 0 : index
    %c0_3 = arith.constant 0 : index
    %2 = vector.load %arg2[%c0_2, %c0_3] : memref<256x768xf32, #tpu.memory_space<vmem>>, vector<256x768xf32>
    %cst = arith.constant dense<0.000000e+00> : vector<8x768xf32>
    %3 = tpu.matmul %1, %2, %cst {dimension_numbers = #tpu.dot_dimension_numbers<[1], [0], [0], [1], [0, 0, 1, 1], [], []>} : vector<8x256xf32>, vector<256x768xf32>, vector<8x768xf32> -> vector<8x768xf32>
    %c0_4 = arith.constant 0 : index
    %c0_5 = arith.constant 0 : index
    %4 = vector.load %arg3[%c0_4, %c0_5] : memref<1x768xf32, #tpu.memory_space<vmem>>, vector<1x768xf32>
    %5 = vector.broadcast %4 : vector<1x768xf32> to vector<8x768xf32>
    %6 = arith.addf %3, %5 : vector<8x768xf32>
    %7 = vector.extract_strided_slice %6 {offsets = [0, 0], sizes = [8, 128], strides = [1, 1]} : vector<8x768xf32> to vector<8x128xf32>
    %cst_6 = arith.constant 0.0883883461 : f32
    %8 = vector.broadcast %cst_6 : f32 to vector<8x128xf32>
    %9 = arith.mulf %7, %8 : vector<8x128xf32>
    %10 = vector.extract_strided_slice %6 {offsets = [0, 256], sizes = [8, 128], strides = [1, 1]} : vector<8x768xf32> to vector<8x128xf32>
    %11 = vector.extract_strided_slice %6 {offsets = [0, 512], sizes = [8, 128], strides = [1, 1]} : vector<8x768xf32> to vector<8x128xf32>
    %cst_7 = arith.constant dense<0.000000e+00> : vector<8x8xf32>
    %12 = tpu.matmul %9, %10, %cst_7 {dimension_numbers = #tpu.dot_dimension_numbers<[1], [1], [0], [0], [0, 0, 1, 0], [], []>} : vector<8x128xf32>, vector<8x128xf32>, vector<8x8xf32> -> vector<8x8xf32>
    %cst_8 = arith.constant dense<0xFF800000> : vector<8xf32>
    %13 = vector.multi_reduction <maximumf>, %12, %cst_8 [1] : vector<8x8xf32> to vector<8xf32>
    %14 = vector.shape_cast %13 : vector<8xf32> to vector<8x1xf32>
    %15 = vector.broadcast %14 : vector<8x1xf32> to vector<8x8xf32>
    %16 = arith.subf %12, %15 : vector<8x8xf32>
    %17 = math.exp %16 : vector<8x8xf32>
    %cst_9 = arith.constant dense<0.000000e+00> : vector<8xf32>
    %18 = vector.multi_reduction <add>, %17, %cst_9 [1] : vector<8x8xf32> to vector<8xf32>
    %19 = vector.shape_cast %18 : vector<8xf32> to vector<8x1xf32>
    %20 = tpu.reciprocal %19 {approx = true} : vector<8x1xf32> -> vector<8x1xf32>
    %21 = vector.broadcast %20 : vector<8x1xf32> to vector<8x8xf32>
    %22 = arith.mulf %17, %21 : vector<8x8xf32>
    %cst_10 = arith.constant dense<0.000000e+00> : vector<8x128xf32>
    %23 = tpu.matmul %22, %11, %cst_10 {dimension_numbers = #tpu.dot_dimension_numbers<[1], [0], [0], [1], [0, 0, 1, 1], [], []>} : vector<8x8xf32>, vector<8x128xf32>, vector<8x128xf32> -> vector<8x128xf32>
    %24 = vector.extract_strided_slice %6 {offsets = [0, 128], sizes = [8, 128], strides = [1, 1]} : vector<8x768xf32> to vector<8x128xf32>
    %cst_11 = arith.constant 0.0883883461 : f32
    %25 = vector.broadcast %cst_11 : f32 to vector<8x128xf32>
    %26 = arith.mulf %24, %25 : vector<8x128xf32>
    %27 = vector.extract_strided_slice %6 {offsets = [0, 384], sizes = [8, 128], strides = [1, 1]} : vector<8x768xf32> to vector<8x128xf32>
    %28 = vector.extract_strided_slice %6 {offsets = [0, 640], sizes = [8, 128], strides = [1, 1]} : vector<8x768xf32> to vector<8x128xf32>
    %cst_12 = arith.constant dense<0.000000e+00> : vector<8x8xf32>
    %29 = tpu.matmul %26, %27, %cst_12 {dimension_numbers = #tpu.dot_dimension_numbers<[1], [1], [0], [0], [0, 0, 1, 0], [], []>} : vector<8x128xf32>, vector<8x128xf32>, vector<8x8xf32> -> vector<8x8xf32>
    %cst_13 = arith.constant dense<0xFF800000> : vector<8xf32>
    %30 = vector.multi_reduction <maximumf>, %29, %cst_13 [1] : vector<8x8xf32> to vector<8xf32>
    %31 = vector.shape_cast %30 : vector<8xf32> to vector<8x1xf32>
    %32 = vector.broadcast %31 : vector<8x1xf32> to vector<8x8xf32>
    %33 = arith.subf %29, %32 : vector<8x8xf32>
    %34 = math.exp %33 : vector<8x8xf32>
    %cst_14 = arith.constant dense<0.000000e+00> : vector<8xf32>
    %35 = vector.multi_reduction <add>, %34, %cst_14 [1] : vector<8x8xf32> to vector<8xf32>
    %36 = vector.shape_cast %35 : vector<8xf32> to vector<8x1xf32>
    %37 = tpu.reciprocal %36 {approx = true} : vector<8x1xf32> -> vector<8x1xf32>
    %38 = vector.broadcast %37 : vector<8x1xf32> to vector<8x8xf32>
    %39 = arith.mulf %34, %38 : vector<8x8xf32>
    %cst_15 = arith.constant dense<0.000000e+00> : vector<8x128xf32>
    %40 = tpu.matmul %39, %28, %cst_15 {dimension_numbers = #tpu.dot_dimension_numbers<[1], [0], [0], [1], [0, 0, 1, 1], [], []>} : vector<8x8xf32>, vector<8x128xf32>, vector<8x128xf32> -> vector<8x128xf32>
    %41 = tpu.concatenate %23, %40 in 1 : vector<8x128xf32>, vector<8x128xf32> -> vector<8x256xf32>
    %c0_16 = arith.constant 0 : index
    %c0_17 = arith.constant 0 : index
    %42 = vector.load %arg4[%c0_16, %c0_17] : memref<256x256xf32, #tpu.memory_space<vmem>>, vector<256x256xf32>
    %cst_18 = arith.constant dense<0.000000e+00> : vector<8x256xf32>
    %43 = tpu.matmul %41, %42, %cst_18 {dimension_numbers = #tpu.dot_dimension_numbers<[1], [0], [0], [1], [0, 0, 1, 1], [], []>} : vector<8x256xf32>, vector<256x256xf32>, vector<8x256xf32> -> vector<8x256xf32>
    %c0_19 = arith.constant 0 : index
    %c0_20 = arith.constant 0 : index
    %44 = vector.load %arg5[%c0_19, %c0_20] : memref<1x256xf32, #tpu.memory_space<vmem>>, vector<1x256xf32>
    %45 = vector.broadcast %44 : vector<1x256xf32> to vector<8x256xf32>
    %46 = arith.addf %43, %45 : vector<8x256xf32>
    %c0_21 = arith.constant 0 : index
    %c0_22 = arith.constant 0 : index
    %c0_23 = arith.constant 0 : index
    %47 = vector.load %arg6[%c0_21, %c0_22, %c0_23] : memref<1x8x256xf32, #tpu.memory_space<vmem>>, vector<1x8x256xf32>
    %48 = vector.shape_cast %47 : vector<1x8x256xf32> to vector<8x256xf32>
    %49 = vector.shape_cast %46 : vector<8x256xf32> to vector<1x8x256xf32>
    tpu.vector_store %arg6[%c0_21, %c0_22, %c0_23], %49 {strides = array<i32>} : memref<1x8x256xf32, #tpu.memory_space<vmem>>, vector<1x8x256xf32>,
    return
  }
  func.func @transform_0(%arg0: i32) -> (i32, i32, i32) {
    %c0_i32 = arith.constant 0 : i32
    %c0_i32_0 = arith.constant 0 : i32
    %c0_i32_1 = arith.constant 0 : i32
    return %arg0, %c0_i32, %c0_i32_0 : i32, i32, i32
  }
  func.func @transform_1(%arg0: i32) -> (i32, i32) {
    %c0_i32 = arith.constant 0 : i32
    %c0_i32_0 = arith.constant 0 : i32
    %c0_i32_1 = arith.constant 0 : i32
    return %c0_i32, %c0_i32_0 : i32, i32
  }
  func.func @transform_2(%arg0: i32) -> (i32, i32) {
    %c0_i32 = arith.constant 0 : i32
    %c0_i32_0 = arith.constant 0 : i32
    %c0_i32_1 = arith.constant 0 : i32
    return %c0_i32, %c0_i32_0 : i32, i32
  }
  func.func @transform_3(%arg0: i32) -> (i32, i32) {
    %c0_i32 = arith.constant 0 : i32
    %c0_i32_0 = arith.constant 0 : i32
    %c0_i32_1 = arith.constant 0 : i32
    return %c0_i32, %c0_i32_0 : i32, i32
  }
  func.func @transform_4(%arg0: i32) -> (i32, i32) {
    %c0_i32 = arith.constant 0 : i32
    %c0_i32_0 = arith.constant 0 : i32
    %c0_i32_1 = arith.constant 0 : i32
    return %c0_i32, %c0_i32_0 : i32, i32
  }
  func.func @transform_5(%arg0: i32) -> (i32, i32, i32) {
    %c0_i32 = arith.constant 0 : i32
    %c0_i32_0 = arith.constant 0 : i32
    %c0_i32_1 = arith.constant 0 : i32
    return %arg0, %c0_i32, %c0_i32_0 : i32, i32, i32
  }
}

</mosaic_0001>

<llo_original>
// kernel: tnt_attention.1
$region0: #{tnt_attention.1}
  #allocation0 [shape = 'u32[]', space=smem, size = 0x4, offset = 0x4, fixed_abs, tag = 'smem constant byte address 0x4 - core index']
  #allocation1 [shape = 'u32[144,128]{1,0:T(1,128)}', space=vmem, size = 0x12000, scoped, tag = 'internal scratch']
  %s0 = inlined_call_operand.vmem [shape: f32[2,8,256], index: 0, kind: input, shape index: {}]
  %s1 = inlined_call_operand.vmem [shape: f32[256,768], index: 1, kind: input, shape index: {}]
  %s2 = inlined_call_operand.vmem [shape: f32[1,768], index: 2, kind: input, shape index: {}]
  %s3 = inlined_call_operand.vmem [shape: f32[256,256], index: 3, kind: input, shape index: {}]
  %s4 = inlined_call_operand.vmem [shape: f32[1,256], index: 4, kind: input, shape index: {}]
  %s5 = inlined_call_operand.hbm [shape: f32[2,8,256], index: 5, kind: output, shape index: {}]
  %s6 = sld [smem:[#allocation0]]
  $region53: #{tnt_attention.1} parent=0
    _
  %s8 = ssub.s32 1, %s6
  %s9 = scalar_select 0, %s8, %s6
  $region1: #{tnt_attention.1} parent=0
    #allocation2 [shape = 'u8[16384]{0}', space=vmem, size = 0x4000, scoped, tag = 'output window, operand 0']
    #allocation3 [shape = 's32[2]{0}', space=sflag, size = 0x8, scoped, tag = 'scoped memory for tnt_attention.1']
    %10 = vsyncpa [#allocation3], 0
    %s11 = scalar_lea.sflag [#allocation3], 1
    %12 = vsyncpa %s11, 0
    loop: start=0, step=1, limit=4
    $region2: #{tnt_attention.1} parent=1 // loop_pre_header
      _
    $region3: #{tnt_attention.1} parent=1 // loop_header
      %s14 = sphi 0, %s18
      %p15 = scmp.ge.s32.totalorder %s14, 4
      %s24 = sphi 0, %s26
      %s27 = sphi 0, %s24
      %s28 = sphi 0, %s27
      %s44 = sphi 0, %s28
      %s48 = sphi 0, %s48
      %s50 = sphi 0, %s48
      %s51 = sphi 0, %s50
      %s65 = sphi 0, %s51
      %s69 = sphi 0, %s69
      %s71 = sphi 0, %s69
      %s72 = sphi 0, %s71
      %s86 = sphi 0, %s72
      %s90 = sphi 0, %s90
      %s92 = sphi 0, %s90
      %s93 = sphi 0, %s92
      %s107 = sphi 0, %s93
      %s111 = sphi 0, %s111
      %s113 = sphi 0, %s111
      %s114 = sphi 0, %s113
      %s128 = sphi 0, %s114
      %s134 = sphi 0, %s136
      %s137 = sphi 0, %s134
      %s138 = sphi 0, %s137
      %s154 = sphi 0, %s138
    $region4: #{tnt_attention.1} parent=1 // loop_header_branch
      %17 = sbr.rel (%p15) target = $region8
    $region5: #{tnt_attention.1} parent=1 // loop_body
      %s19 = ssub.s32 %s14, 1
      %s20 = ssub.s32 %s14, 2
      %s21 = sadd.s32 %s14, 1
      %s22 = ssub.s32 %s14, %s21
      %p23 = scmp.eq.s32.totalorder %s22, 0
      %s25 = sadd.s32 %s24, 1
      %s26 = scalar_select %p23, %s24, %s25
      %p29 = pneg %p23
      %p30 = scmp.eq.s32.totalorder %s14, 1
      %p31 = por %p29, %p30
      %p32 = scmp.ne.s32.totalorder %s24, %s27
      %p33 = scmp.eq.s32.totalorder %s14, 0
      %p34 = por %p32, %p33
      %p35 = scmp.ne.s32.totalorder %s24, %s27
      %p36 = scmp.eq.s32.totalorder %s19, 1
      %p37 = por %p35, %p36
      %p38 = scmp.ne.s32.totalorder %s27, %s28
      %p39 = scmp.eq.s32.totalorder %s19, 0
      %p40 = por %p38, %p39
      %p41 = scmp.ne.s32.totalorder %s27, %s28
      %p42 = scmp.eq.s32.totalorder %s20, 1
      %p43 = por %p41, %p42
      %p45 = scmp.ne.s32.totalorder %s28, %s44
      %p46 = scmp.eq.s32.totalorder %s20, 0
      %p47 = por %p45, %p46
      %s49 = sadd.s32 %s48, 1
      %p52 = scmp.eq.s32.totalorder %s14, 1
      %p53 = scmp.ne.s32.totalorder %s48, %s50
      %p54 = scmp.eq.s32.totalorder %s14, 0
      %p55 = por %p53, %p54
      %p56 = scmp.ne.s32.totalorder %s48, %s50
      %p57 = scmp.eq.s32.totalorder %s19, 1
      %p58 = por %p56, %p57
      %p59 = scmp.ne.s32.totalorder %s50, %s51
      %p60 = scmp.eq.s32.totalorder %s19, 0
      %p61 = por %p59, %p60
      %p62 = scmp.ne.s32.totalorder %s50, %s51
      %p63 = scmp.eq.s32.totalorder %s20, 1
      %p64 = por %p62, %p63
      %p66 = scmp.ne.s32.totalorder %s51, %s65
      %p67 = scmp.eq.s32.totalorder %s20, 0
      %p68 = por %p66, %p67
      %s70 = sadd.s32 %s69, 1
      %p73 = scmp.eq.s32.totalorder %s14, 1
      %p74 = scmp.ne.s32.totalorder %s69, %s71
      %p75 = scmp.eq.s32.totalorder %s14, 0
      %p76 = por %p74, %p75
      %p77 = scmp.ne.s32.totalorder %s69, %s71
      %p78 = scmp.eq.s32.totalorder %s19, 1
      %p79 = por %p77, %p78
      %p80 = scmp.ne.s32.totalorder %s71, %s72
      %p81 = scmp.eq.s32.totalorder %s19, 0
      %p82 = por %p80, %p81
      %p83 = scmp.ne.s32.totalorder %s71, %s72
      %p84 = scmp.eq.s32.totalorder %s20, 1
      %p85 = por %p83, %p84
      %p87 = scmp.ne.s32.totalorder %s72, %s86
      %p88 = scmp.eq.s32.totalorder %s20, 0
      %p89 = por %p87, %p88
      %s91 = sadd.s32 %s90, 1
      %p94 = scmp.eq.s32.totalorder %s14, 1
      %p95 = scmp.ne.s32.totalorder %s90, %s92
      %p96 = scmp.eq.s32.totalorder %s14, 0
      %p97 = por %p95, %p96
      %p98 = scmp.ne.s32.totalorder %s90, %s92
      %p99 = scmp.eq.s32.totalorder %s19, 1
      %p100 = por %p98, %p99
      %p101 = scmp.ne.s32.totalorder %s92, %s93
      %p102 = scmp.eq.s32.totalorder %s19, 0
      %p103 = por %p101, %p102
      %p104 = scmp.ne.s32.totalorder %s92, %s93
      %p105 = scmp.eq.s32.totalorder %s20, 1
      %p106 = por %p104, %p105
      %p108 = scmp.ne.s32.totalorder %s93, %s107
      %p109 = scmp.eq.s32.totalorder %s20, 0
      %p110 = por %p108, %p109
      %s112 = sadd.s32 %s111, 1
      %p115 = scmp.eq.s32.totalorder %s14, 1
      %p116 = scmp.ne.s32.totalorder %s111, %s113
      %p117 = scmp.eq.s32.totalorder %s14, 0
      %p118 = por %p116, %p117
      %p119 = scmp.ne.s32.totalorder %s111, %s113
      %p120 = scmp.eq.s32.totalorder %s19, 1
      %p121 = por %p119, %p120
      %p122 = scmp.ne.s32.totalorder %s113, %s114
      %p123 = scmp.eq.s32.totalorder %s19, 0
      %p124 = por %p122, %p123
      %p125 = scmp.ne.s32.totalorder %s113, %s114
      %p126 = scmp.eq.s32.totalorder %s20, 1
      %p127 = por %p125, %p126
      %p129 = scmp.ne.s32.totalorder %s114, %s128
      %p130 = scmp.eq.s32.totalorder %s20, 0
      %p131 = por %p129, %p130
      %s132 = ssub.s32 %s14, %s21
      %p133 = scmp.eq.s32.totalorder %s132, 0
      %s135 = sadd.s32 %s134, 1
      %s136 = scalar_select %p133, %s134, %s135
      %p139 = pneg %p133
      %p140 = scmp.eq.s32.totalorder %s14, 1
      %p141 = por %p139, %p140
      %p142 = scmp.ne.s32.totalorder %s134, %s137
      %p143 = scmp.eq.s32.totalorder %s14, 0
      %p144 = por %p142, %p143
      %p145 = scmp.ne.s32.totalorder %s134, %s137
      %p146 = scmp.eq.s32.totalorder %s19, 1
      %p147 = por %p145, %p146
      %p148 = scmp.ne.s32.totalorder %s137, %s138
      %p149 = scmp.eq.s32.totalorder %s19, 0
      %p150 = por %p148, %p149
      %p151 = scmp.ne.s32.totalorder %s137, %s138
      %p152 = scmp.eq.s32.totalorder %s20, 1
      %p153 = por %p151, %p152
      %p155 = scmp.ne.s32.totalorder %s138, %s154
      %p156 = scmp.eq.s32.totalorder %s20, 0
      %p157 = por %p155, %p156
      %p158 = scmp.le.s32.totalorder 1, %s14
      %p159 = scmp.lt.s32.totalorder %s14, 3
      %p160 = pnand %p158, %p159
      %p161 = pneg %p160
      // Predicated region
      $region9: #{tnt_attention.1} parent=5 // pred_check
        _
      $region10: #{tnt_attention.1} parent=5 // pred_check_branch
        %163 = sbr.rel (%p160) target = $region12
      $region11: #{tnt_attention.1} parent=5 // pred_region
        %s164 = ssub.s32 %s14, 1
        // Predicated region
        $region13: #{tnt_attention.1} parent=11 // pred_check
          %p165 = pneg %p61
        $region14: #{tnt_attention.1} parent=11 // pred_check_branch
          %167 = sbr.rel (%p165) target = $region16
        $region15: #{tnt_attention.1} parent=11 // pred_region
          _
        $region16: #{tnt_attention.1} parent=11 // pred_fallthru
          _
        // Predicated region
        $region17: #{tnt_attention.1} parent=11 // pred_check
          %p168 = pneg %p82
        $region18: #{tnt_attention.1} parent=11 // pred_check_branch
          %170 = sbr.rel (%p168) target = $region20
        $region19: #{tnt_attention.1} parent=11 // pred_region
          _
        $region20: #{tnt_attention.1} parent=11 // pred_fallthru
          _
        // Predicated region
        $region21: #{tnt_attention.1} parent=11 // pred_check
          %p171 = pneg %p103
        $region22: #{tnt_attention.1} parent=11 // pred_check_branch
          %173 = sbr.rel (%p171) target = $region24
        $region23: #{tnt_attention.1} parent=11 // pred_region
          _
        $region24: #{tnt_attention.1} parent=11 // pred_fallthru
          _
        // Predicated region
        $region25: #{tnt_attention.1} parent=11 // pred_check
          %p174 = pneg %p124
        $region26: #{tnt_attention.1} parent=11 // pred_check_branch
          %176 = sbr.rel (%p174) target = $region28
        $region27: #{tnt_attention.1} parent=11 // pred_region
          _
        $region28: #{tnt_attention.1} parent=11 // pred_fallthru
          _
      $region12: #{tnt_attention.1} parent=5 // pred_fallthru
        _
      %p177 = scmp.lt.s32.totalorder %s14, 2
      // Predicated region
      $region29: #{tnt_attention.1} parent=5 // pred_check
        %p178 = pneg %p177
      $region30: #{tnt_attention.1} parent=5 // pred_check_branch
        %180 = sbr.rel (%p178) target = $region32
      $region31: #{tnt_attention.1} parent=5 // pred_region
        // Predicated region
        $region33: #{tnt_attention.1} parent=31 // pred_check
          %p181 = pneg %p34
        $region34: #{tnt_attention.1} parent=31 // pred_check_branch
          %183 = sbr.rel (%p181) target = $region36
        $region35: #{tnt_attention.1} parent=31 // pred_region
          %p184 = scmp.lt.s32.totalorder %s14, 1
          %s185 = scalar_select %p184, %s14, 1
          %s186 = smul.addr %s185, 2
          %s187 = smul.addr %s186, 8
          %s188 = scalar_lea.vmem %s0, %s187
        $region36: #{tnt_attention.1} parent=31 // pred_fallthru
          _
      $region32: #{tnt_attention.1} parent=5 // pred_fallthru
        _
      %p189 = scmp.le.s32.totalorder 1, %s14
      %p190 = scmp.lt.s32.totalorder %s14, 3
      %p191 = pnand %p189, %p190
      %p192 = pneg %p191
      // Predicated region
      $region37: #{tnt_attention.1} parent=5 // pred_check
        _
      $region38: #{tnt_attention.1} parent=5 // pred_check_branch
        %194 = sbr.rel (%p191) target = $region40
      $region39: #{tnt_attention.1} parent=5 // pred_region
        %s195 = ssub.s32 %s14, 1
        %p196 = scmp.lt.s32.totalorder %s19, 1
        %s197 = scalar_select %p196, %s19, 1
        %s198 = smul.addr %s197, 2
        %s199 = smul.addr %s198, 8
        %s200 = scalar_lea.vmem %s0, %s199
        %p201 = pneg %p40
        %p202 = pneg %p37
        %p203 = pneg %p61
        %p204 = pneg %p58
        %p205 = pneg %p82
        %p206 = pneg %p79
        %p207 = pneg %p103
        %p208 = pneg %p100
        %p209 = pneg %p124
        %p210 = pneg %p121
        %p211 = pneg %p150
        %p212 = pneg %p147
        %s213 = sand.u32 %s137, 1
        %s214 = scalar_lea.sflag [#allocation3], %s213
        %s215 = sand.u32 %s137, 1
        %s216 = smul.addr %s215, 16
        %s217 = scalar_lea.vmem [#allocation2], %s216
        %p218 = scmp.lt.s32.totalorder %s19, 1
        %s219 = scalar_select %p218, %s19, 1
        %s220 = smul.addr %s219, 2
        %s221 = smul.addr %s220, 8
        %s222 = scalar_lea.vmem %s0, %s221
        %v223 = vld [vmem:[%s222] sm:$0xff]
        %v224 = vld [vmem:[%s222 + $0x8] sm:$0xff]
        %v225 = vld [vmem:[%s1] sm:$0xff]
        %v226 = vld [vmem:[%s1 + $0x8] sm:$0xff]
        %v227 = vld [vmem:[%s1 + $0x10] sm:$0xff]
        %v228 = vld [vmem:[%s1 + $0x18] sm:$0xff]
        %v229 = vld [vmem:[%s1 + $0x20] sm:$0xff]
        %v230 = vld [vmem:[%s1 + $0x28] sm:$0xff]
        %v231 = vld [vmem:[%s1 + $0x30] sm:$0xff]
        %v232 = vld [vmem:[%s1 + $0x38] sm:$0xff]
        %v233 = vld [vmem:[%s1 + $0x40] sm:$0xff]
        %v234 = vld [vmem:[%s1 + $0x48] sm:$0xff]
        %v235 = vld [vmem:[%s1 + $0x50] sm:$0xff]
        %v236 = vld [vmem:[%s1 + $0x58] sm:$0xff]
        %v237 = vld [vmem:[%s1 + $0x60] sm:$0xff]
        %v238 = vld [vmem:[%s1 + $0x68] sm:$0xff]
        %v239 = vld [vmem:[%s1 + $0x70] sm:$0xff]
        %v240 = vld [vmem:[%s1 + $0x78] sm:$0xff]
        %v241 = vld [vmem:[%s1 + $0x80] sm:$0xff]
        %v242 = vld [vmem:[%s1 + $0x88] sm:$0xff]
        %v243 = vld [vmem:[%s1 + $0x90] sm:$0xff]
        %v244 = vld [vmem:[%s1 + $0x98] sm:$0xff]
        %v245 = vld [vmem:[%s1 + $0xa0] sm:$0xff]
        %v246 = vld [vmem:[%s1 + $0xa8] sm:$0xff]
        %v247 = vld [vmem:[%s1 + $0xb0] sm:$0xff]
        %v248 = vld [vmem:[%s1 + $0xb8] sm:$0xff]
        %v249 = vld [vmem:[%s1 + $0xc0] sm:$0xff]
        %v250 = vld [vmem:[%s1 + $0xc8] sm:$0xff]
        %v251 = vld [vmem:[%s1 + $0xd0] sm:$0xff]
        %v252 = vld [vmem:[%s1 + $0xd8] sm:$0xff]
        %v253 = vld [vmem:[%s1 + $0xe0] sm:$0xff]
        %v254 = vld [vmem:[%s1 + $0xe8] sm:$0xff]
        %v255 = vld [vmem:[%s1 + $0xf0] sm:$0xff]
        %v256 = vld [vmem:[%s1 + $0xf8] sm:$0xff]
        %v257 = vld [vmem:[%s1 + $0x100] sm:$0xff]
        %v258 = vld [vmem:[%s1 + $0x108] sm:$0xff]
        %v259 = vld [vmem:[%s1 + $0x110] sm:$0xff]
        %v260 = vld [vmem:[%s1 + $0x118] sm:$0xff]
        %v261 = vld [vmem:[%s1 + $0x120] sm:$0xff]
        %v262 = vld [vmem:[%s1 + $0x128] sm:$0xff]
        %v263 = vld [vmem:[%s1 + $0x130] sm:$0xff]
        %v264 = vld [vmem:[%s1 + $0x138] sm:$0xff]
        %v265 = vld [vmem:[%s1 + $0x140] sm:$0xff]
        %v266 = vld [vmem:[%s1 + $0x148] sm:$0xff]
        %v267 = vld [vmem:[%s1 + $0x150] sm:$0xff]
        %v268 = vld [vmem:[%s1 + $0x158] sm:$0xff]
        %v269 = vld [vmem:[%s1 + $0x160] sm:$0xff]
        %v270 = vld [vmem:[%s1 + $0x168] sm:$0xff]
        %v271 = vld [vmem:[%s1 + $0x170] sm:$0xff]
        %v272 = vld [vmem:[%s1 + $0x178] sm:$0xff]
        %v273 = vld [vmem:[%s1 + $0x180] sm:$0xff]
        %v274 = vld [vmem:[%s1 + $0x188] sm:$0xff]
        %v275 = vld [vmem:[%s1 + $0x190] sm:$0xff]
        %v276 = vld [vmem:[%s1 + $0x198] sm:$0xff]
        %v277 = vld [vmem:[%s1 + $0x1a0] sm:$0xff]
        %v278 = vld [vmem:[%s1 + $0x1a8] sm:$0xff]
        %v279 = vld [vmem:[%s1 + $0x1b0] sm:$0xff]
        %v280 = vld [vmem:[%s1 + $0x1b8] sm:$0xff]
        %v281 = vld [vmem:[%s1 + $0x1c0] sm:$0xff]
        %v282 = vld [vmem:[%s1 + $0x1c8] sm:$0xff]
        %v283 = vld [vmem:[%s1 + $0x1d0] sm:$0xff]
        %v284 = vld [vmem:[%s1 + $0x1d8] sm:$0xff]
        %v285 = vld [vmem:[%s1 + $0x1e0] sm:$0xff]
        %v286 = vld [vmem:[%s1 + $0x1e8] sm:$0xff]
        %v287 = vld [vmem:[%s1 + $0x1f0] sm:$0xff]
        %v288 = vld [vmem:[%s1 + $0x1f8] sm:$0xff]
        %v289 = vld [vmem:[%s1 + $0x200] sm:$0xff]
        %v290 = vld [vmem:[%s1 + $0x208] sm:$0xff]
        %v291 = vld [vmem:[%s1 + $0x210] sm:$0xff]
        %v292 = vld [vmem:[%s1 + $0x218] sm:$0xff]
        %v293 = vld [vmem:[%s1 + $0x220] sm:$0xff]
        %v294 = vld [vmem:[%s1 + $0x228] sm:$0xff]
        %v295 = vld [vmem:[%s1 + $0x230] sm:$0xff]
        %v296 = vld [vmem:[%s1 + $0x238] sm:$0xff]
        %v297 = vld [vmem:[%s1 + $0x240] sm:$0xff]
        %v298 = vld [vmem:[%s1 + $0x248] sm:$0xff]
        %v299 = vld [vmem:[%s1 + $0x250] sm:$0xff]
        %v300 = vld [vmem:[%s1 + $0x258] sm:$0xff]
        %v301 = vld [vmem:[%s1 + $0x260] sm:$0xff]
        %v302 = vld [vmem:[%s1 + $0x268] sm:$0xff]
        %v303 = vld [vmem:[%s1 + $0x270] sm:$0xff]
        %v304 = vld [vmem:[%s1 + $0x278] sm:$0xff]
        %v305 = vld [vmem:[%s1 + $0x280] sm:$0xff]
        %v306 = vld [vmem:[%s1 + $0x288] sm:$0xff]
        %v307 = vld [vmem:[%s1 + $0x290] sm:$0xff]
        %v308 = vld [vmem:[%s1 + $0x298] sm:$0xff]
        %v309 = vld [vmem:[%s1 + $0x2a0] sm:$0xff]
        %v310 = vld [vmem:[%s1 + $0x2a8] sm:$0xff]
        %v311 = vld [vmem:[%s1 + $0x2b0] sm:$0xff]
        %v312 = vld [vmem:[%s1 + $0x2b8] sm:$0xff]
        %v313 = vld [vmem:[%s1 + $0x2c0] sm:$0xff]
        %v314 = vld [vmem:[%s1 + $0x2c8] sm:$0xff]
        %v315 = vld [vmem:[%s1 + $0x2d0] sm:$0xff]
        %v316 = vld [vmem:[%s1 + $0x2d8] sm:$0xff]
        %v317 = vld [vmem:[%s1 + $0x2e0] sm:$0xff]
        %v318 = vld [vmem:[%s1 + $0x2e8] sm:$0xff]
        %v319 = vld [vmem:[%s1 + $0x2f0] sm:$0xff]
        %v320 = vld [vmem:[%s1 + $0x2f8] sm:$0xff]
        %v321 = vld [vmem:[%s1 + $0x300] sm:$0xff]
        %v322 = vld [vmem:[%s1 + $0x308] sm:$0xff]
        %v323 = vld [vmem:[%s1 + $0x310] sm:$0xff]
        %v324 = vld [vmem:[%s1 + $0x318] sm:$0xff]
        %v325 = vld [vmem:[%s1 + $0x320] sm:$0xff]
        %v326 = vld [vmem:[%s1 + $0x328] sm:$0xff]
        %v327 = vld [vmem:[%s1 + $0x330] sm:$0xff]
        %v328 = vld [vmem:[%s1 + $0x338] sm:$0xff]
        %v329 = vld [vmem:[%s1 + $0x340] sm:$0xff]
        %v330 = vld [vmem:[%s1 + $0x348] sm:$0xff]
        %v331 = vld [vmem:[%s1 + $0x350] sm:$0xff]
        %v332 = vld [vmem:[%s1 + $0x358] sm:$0xff]
        %v333 = vld [vmem:[%s1 + $0x360] sm:$0xff]
        %v334 = vld [vmem:[%s1 + $0x368] sm:$0xff]
        %v335 = vld [vmem:[%s1 + $0x370] sm:$0xff]
        %v336 = vld [vmem:[%s1 + $0x378] sm:$0xff]
        %v337 = vld [vmem:[%s1 + $0x380] sm:$0xff]
        %v338 = vld [vmem:[%s1 + $0x388] sm:$0xff]
        %v339 = vld [vmem:[%s1 + $0x390] sm:$0xff]
        %v340 = vld [vmem:[%s1 + $0x398] sm:$0xff]
        %v341 = vld [vmem:[%s1 + $0x3a0] sm:$0xff]
        %v342 = vld [vmem:[%s1 + $0x3a8] sm:$0xff]
        %v343 = vld [vmem:[%s1 + $0x3b0] sm:$0xff]
        %v344 = vld [vmem:[%s1 + $0x3b8] sm:$0xff]
        %v345 = vld [vmem:[%s1 + $0x3c0] sm:$0xff]
        %v346 = vld [vmem:[%s1 + $0x3c8] sm:$0xff]
        %v347 = vld [vmem:[%s1 + $0x3d0] sm:$0xff]
        %v348 = vld [vmem:[%s1 + $0x3d8] sm:$0xff]
        %v349 = vld [vmem:[%s1 + $0x3e0] sm:$0xff]
        %v350 = vld [vmem:[%s1 + $0x3e8] sm:$0xff]
        %v351 = vld [vmem:[%s1 + $0x3f0] sm:$0xff]
        %v352 = vld [vmem:[%s1 + $0x3f8] sm:$0xff]
        %v353 = vld [vmem:[%s1 + $0x400] sm:$0xff]
        %v354 = vld [vmem:[%s1 + $0x408] sm:$0xff]
        %v355 = vld [vmem:[%s1 + $0x410] sm:$0xff]
        %v356 = vld [vmem:[%s1 + $0x418] sm:$0xff]
        %v357 = vld [vmem:[%s1 + $0x420] sm:$0xff]
        %v358 = vld [vmem:[%s1 + $0x428] sm:$0xff]
        %v359 = vld [vmem:[%s1 + $0x430] sm:$0xff]
        %v360 = vld [vmem:[%s1 + $0x438] sm:$0xff]
        %v361 = vld [vmem:[%s1 + $0x440] sm:$0xff]
        %v362 = vld [vmem:[%s1 + $0x448] sm:$0xff]
        %v363 = vld [vmem:[%s1 + $0x450] sm:$0xff]
        %v364 = vld [vmem:[%s1 + $0x458] sm:$0xff]
        %v365 = vld [vmem:[%s1 + $0x460] sm:$0xff]
        %v366 = vld [vmem:[%s1 + $0x468] sm:$0xff]
        %v367 = vld [vmem:[%s1 + $0x470] sm:$0xff]
        %v368 = vld [vmem:[%s1 + $0x478] sm:$0xff]
        %v369 = vld [vmem:[%s1 + $0x480] sm:$0xff]
        %v370 = vld [vmem:[%s1 + $0x488] sm:$0xff]
        %v371 = vld [vmem:[%s1 + $0x490] sm:$0xff]
        %v372 = vld [vmem:[%s1 + $0x498] sm:$0xff]
        %v373 = vld [vmem:[%s1 + $0x4a0] sm:$0xff]
        %v374 = vld [vmem:[%s1 + $0x4a8] sm:$0xff]
        %v375 = vld [vmem:[%s1 + $0x4b0] sm:$0xff]
        %v376 = vld [vmem:[%s1 + $0x4b8] sm:$0xff]
        %v377 = vld [vmem:[%s1 + $0x4c0] sm:$0xff]
        %v378 = vld [vmem:[%s1 + $0x4c8] sm:$0xff]
        %v379 = vld [vmem:[%s1 + $0x4d0] sm:$0xff]
        %v380 = vld [vmem:[%s1 + $0x4d8] sm:$0xff]
        %v381 = vld [vmem:[%s1 + $0x4e0] sm:$0xff]
        %v382 = vld [vmem:[%s1 + $0x4e8] sm:$0xff]
        %v383 = vld [vmem:[%s1 + $0x4f0] sm:$0xff]
        %v384 = vld [vmem:[%s1 + $0x4f8] sm:$0xff]
        %v385 = vld [vmem:[%s1 + $0x500] sm:$0xff]
        %v386 = vld [vmem:[%s1 + $0x508] sm:$0xff]
        %v387 = vld [vmem:[%s1 + $0x510] sm:$0xff]
        %v388 = vld [vmem:[%s1 + $0x518] sm:$0xff]
        %v389 = vld [vmem:[%s1 + $0x520] sm:$0xff]
        %v390 = vld [vmem:[%s1 + $0x528] sm:$0xff]
        %v391 = vld [vmem:[%s1 + $0x530] sm:$0xff]
        %v392 = vld [vmem:[%s1 + $0x538] sm:$0xff]
        %v393 = vld [vmem:[%s1 + $0x540] sm:$0xff]
        %v394 = vld [vmem:[%s1 + $0x548] sm:$0xff]
        %v395 = vld [vmem:[%s1 + $0x550] sm:$0xff]
        %v396 = vld [vmem:[%s1 + $0x558] sm:$0xff]
        %v397 = vld [vmem:[%s1 + $0x560] sm:$0xff]
        %v398 = vld [vmem:[%s1 + $0x568] sm:$0xff]
        %v399 = vld [vmem:[%s1 + $0x570] sm:$0xff]
        %v400 = vld [vmem:[%s1 + $0x578] sm:$0xff]
        %v401 = vld [vmem:[%s1 + $0x580] sm:$0xff]
        %v402 = vld [vmem:[%s1 + $0x588] sm:$0xff]
        %v403 = vld [vmem:[%s1 + $0x590] sm:$0xff]
        %v404 = vld [vmem:[%s1 + $0x598] sm:$0xff]
        %v405 = vld [vmem:[%s1 + $0x5a0] sm:$0xff]
        %v406 = vld [vmem:[%s1 + $0x5a8] sm:$0xff]
        %v407 = vld [vmem:[%s1 + $0x5b0] sm:$0xff]
        %v408 = vld [vmem:[%s1 + $0x5b8] sm:$0xff]
        %v409 = vld [vmem:[%s1 + $0x5c0] sm:$0xff]
        %v410 = vld [vmem:[%s1 + $0x5c8] sm:$0xff]
        %v411 = vld [vmem:[%s1 + $0x5d0] sm:$0xff]
        %v412 = vld [vmem:[%s1 + $0x5d8] sm:$0xff]
        %v413 = vld [vmem:[%s1 + $0x5e0] sm:$0xff]
        %v414 = vld [vmem:[%s1 + $0x5e8] sm:$0xff]
        %v415 = vld [vmem:[%s1 + $0x5f0] sm:$0xff]
        %v416 = vld [vmem:[%s1 + $0x5f8] sm:$0xff]
        %v417 = vld [vmem:[%s2] sm:$0x3f]
        %v419 = vlaneseq
        %v420 = vshrl.u32 %v419, 7
        %v421 = vsub.s32 0, %v420
        %v422 = vrot.slane %v417, %v421
        %v423 = vlaneseq
        %v424 = vshrl.u32 %v423, 7
        %v425 = vsub.s32 1, %v424
        %v426 = vrot.slane %v417, %v425
        %v427 = vlaneseq
        %v428 = vshrl.u32 %v427, 7
        %v429 = vsub.s32 2, %v428
        %v430 = vrot.slane %v417, %v429
        %v431 = vlaneseq
        %v432 = vshrl.u32 %v431, 7
        %v433 = vsub.s32 3, %v432
        %v434 = vrot.slane %v417, %v433
        %v435 = vlaneseq
        %v436 = vshrl.u32 %v435, 7
        %v437 = vsub.s32 4, %v436
        %v438 = vrot.slane %v417, %v437
        %v439 = vlaneseq
        %v440 = vshrl.u32 %v439, 7
        %v441 = vsub.s32 5, %v440
        %v442 = vrot.slane %v417, %v441
        %449 = vmatprep.subr.mxu0 %v316
        %450 = vmatpush1.msra.mxu0 %v315
        %451 = vmatprep.subr.mxu0 %v310
        %452 = vmatpush1.msra.mxu0 %v309
        %453 = vmatprep.subr.mxu0 %v304
        %454 = vmatpush1.msra.mxu0 %v303
        %455 = vmatprep.subr.mxu0 %v298
        %456 = vmatpush1.msra.mxu0 %v297
        %457 = vmatprep.subr.mxu0 %v292
        %458 = vmatpush1.msra.mxu0 %v291
        %459 = vmatprep.subr.mxu0 %v286
        %460 = vmatpush1.msra.mxu0 %v285
        %461 = vmatprep.subr.mxu0 %v280
        %462 = vmatpush1.msra.mxu0 %v279
        %463 = vmatprep.subr.mxu0 %v274
        %464 = vmatpush1.msra.mxu0 %v273
        %465 = vmatprep.subr.mxu0 %v268
        %466 = vmatpush1.msra.mxu0 %v267
        %467 = vmatprep.subr.mxu0 %v262
        %468 = vmatpush1.msra.mxu0 %v261
        %469 = vmatprep.subr.mxu0 %v256
        %470 = vmatpush1.msra.mxu0 %v255
        %471 = vmatprep.subr.mxu0 %v250
        %472 = vmatpush1.msra.mxu0 %v249
        %473 = vmatprep.subr.mxu0 %v244
        %474 = vmatpush1.msra.mxu0 %v243
        %475 = vmatprep.subr.mxu0 %v238
        %476 = vmatpush1.msra.mxu0 %v237
        %477 = vmatprep.subr.mxu0 %v232
        %478 = vmatpush1.msra.mxu0 %v231
        %479 = vmatprep.subr.mxu0 %v226
        %480 = vmatpush1.msra.mxu0 %v225
        %481 = vmatprep.subr.mxu0 %v412
        %482 = vmatpush2.msra.mxu0 %v411
        %483 = vmatprep.subr.mxu0 %v406
        %484 = vmatpush2.msra.mxu0 %v405
        %485 = vmatprep.subr.mxu0 %v400
        %486 = vmatpush2.msra.mxu0 %v399
        %487 = vmatprep.subr.mxu0 %v394
        %488 = vmatpush2.msra.mxu0 %v393
        %489 = vmatprep.subr.mxu0 %v388
        %490 = vmatpush2.msra.mxu0 %v387
        %491 = vmatprep.subr.mxu0 %v382
        %492 = vmatpush2.msra.mxu0 %v381
        %493 = vmatprep.subr.mxu0 %v376
        %494 = vmatpush2.msra.mxu0 %v375
        %495 = vmatprep.subr.mxu0 %v370
        %496 = vmatpush2.msra.mxu0 %v369
        %497 = vmatprep.subr.mxu0 %v364
        %498 = vmatpush2.msra.mxu0 %v363
        %499 = vmatprep.subr.mxu0 %v358
        %500 = vmatpush2.msra.mxu0 %v357
        %501 = vmatprep.subr.mxu0 %v352
        %502 = vmatpush2.msra.mxu0 %v351
        %503 = vmatprep.subr.mxu0 %v346
        %504 = vmatpush2.msra.mxu0 %v345
        %505 = vmatprep.subr.mxu0 %v340
        %506 = vmatpush2.msra.mxu0 %v339
        %507 = vmatprep.subr.mxu0 %v334
        %508 = vmatpush2.msra.mxu0 %v333
        %509 = vmatprep.subr.mxu0 %v328
        %510 = vmatpush2.msra.mxu0 %v327
        %511 = vmatprep.subr.mxu0 %v322
        %512 = vmatpush2.msra.mxu0 %v321
        %513 = vmatprep.mubr.f32.mxu0 %v224
        %514 = vmatmul.mubr.f32.gmra.mxu0 %v223
        %v515 = vpop.f32.mrf.mxu0
        %v516 = vadd.f32 %v422, %v515
        %v517 = vpop.f32.mrf.mxu0
        %v518 = vadd.f32 %v426, %v517
        %519 = vdwg.mxu0
        %520 = vmatprep.subr.mxu0 %v318
        %521 = vmatpush1.msra.mxu0 %v317
        %522 = vmatprep.subr.mxu0 %v312
        %523 = vmatpush1.msra.mxu0 %v311
        %524 = vmatprep.subr.mxu0 %v306
        %525 = vmatpush1.msra.mxu0 %v305
        %526 = vmatprep.subr.mxu0 %v300
        %527 = vmatpush1.msra.mxu0 %v299
        %528 = vmatprep.subr.mxu0 %v294
        %529 = vmatpush1.msra.mxu0 %v293
        %530 = vmatprep.subr.mxu0 %v288
        %531 = vmatpush1.msra.mxu0 %v287
        %532 = vmatprep.subr.mxu0 %v282
        %533 = vmatpush1.msra.mxu0 %v281
        %534 = vmatprep.subr.mxu0 %v276
        %535 = vmatpush1.msra.mxu0 %v275
        %536 = vmatprep.subr.mxu0 %v270
        %537 = vmatpush1.msra.mxu0 %v269
        %538 = vmatprep.subr.mxu0 %v264
        %539 = vmatpush1.msra.mxu0 %v263
        %540 = vmatprep.subr.mxu0 %v258
        %541 = vmatpush1.msra.mxu0 %v257
        %542 = vmatprep.subr.mxu0 %v252
        %543 = vmatpush1.msra.mxu0 %v251
        %544 = vmatprep.subr.mxu0 %v246
        %545 = vmatpush1.msra.mxu0 %v245
        %546 = vmatprep.subr.mxu0 %v240
        %547 = vmatpush1.msra.mxu0 %v239
        %548 = vmatprep.subr.mxu0 %v234
        %549 = vmatpush1.msra.mxu0 %v233
        %550 = vmatprep.subr.mxu0 %v228
        %551 = vmatpush1.msra.mxu0 %v227
        %552 = vmatprep.subr.mxu0 %v414
        %553 = vmatpush2.msra.mxu0 %v413
        %554 = vmatprep.subr.mxu0 %v408
        %555 = vmatpush2.msra.mxu0 %v407
        %556 = vmatprep.subr.mxu0 %v402
        %557 = vmatpush2.msra.mxu0 %v401
        %558 = vmatprep.subr.mxu0 %v396
        %559 = vmatpush2.msra.mxu0 %v395
        %560 = vmatprep.subr.mxu0 %v390
        %561 = vmatpush2.msra.mxu0 %v389
        %562 = vmatprep.subr.mxu0 %v384
        %563 = vmatpush2.msra.mxu0 %v383
        %564 = vmatprep.subr.mxu0 %v378
        %565 = vmatpush2.msra.mxu0 %v377
        %566 = vmatprep.subr.mxu0 %v372
        %567 = vmatpush2.msra.mxu0 %v371
        %568 = vmatprep.subr.mxu0 %v366
        %569 = vmatpush2.msra.mxu0 %v365
        %570 = vmatprep.subr.mxu0 %v360
        %571 = vmatpush2.msra.mxu0 %v359
        %572 = vmatprep.subr.mxu0 %v354
        %573 = vmatpush2.msra.mxu0 %v353
        %574 = vmatprep.subr.mxu0 %v348
        %575 = vmatpush2.msra.mxu0 %v347
        %576 = vmatprep.subr.mxu0 %v342
        %577 = vmatpush2.msra.mxu0 %v341
        %578 = vmatprep.subr.mxu0 %v336
        %579 = vmatpush2.msra.mxu0 %v335
        %580 = vmatprep.subr.mxu0 %v330
        %581 = vmatpush2.msra.mxu0 %v329
        %582 = vmatprep.subr.mxu0 %v324
        %583 = vmatpush2.msra.mxu0 %v323
        %584 = vmatprep.mubr.f32.mxu0 %v224
        %585 = vmatmul.mubr.f32.gmra.mxu0 %v223
        %v586 = vpop.f32.mrf.mxu0
        %v587 = vadd.f32 %v430, %v586
        %v588 = vpop.f32.mrf.mxu0
        %v589 = vadd.f32 %v434, %v588
        %590 = vdwg.mxu0
        %591 = vmatprep.subr.mxu0 %v320
        %592 = vmatpush1.msra.mxu0 %v319
        %593 = vmatprep.subr.mxu0 %v314
        %594 = vmatpush1.msra.mxu0 %v313
        %595 = vmatprep.subr.mxu0 %v308
        %596 = vmatpush1.msra.mxu0 %v307
        %597 = vmatprep.subr.mxu0 %v302
        %598 = vmatpush1.msra.mxu0 %v301
        %599 = vmatprep.subr.mxu0 %v296
        %600 = vmatpush1.msra.mxu0 %v295
        %601 = vmatprep.subr.mxu0 %v290
        %602 = vmatpush1.msra.mxu0 %v289
        %603 = vmatprep.subr.mxu0 %v284
        %604 = vmatpush1.msra.mxu0 %v283
        %605 = vmatprep.subr.mxu0 %v278
        %606 = vmatpush1.msra.mxu0 %v277
        %607 = vmatprep.subr.mxu0 %v272
        %608 = vmatpush1.msra.mxu0 %v271
        %609 = vmatprep.subr.mxu0 %v266
        %610 = vmatpush1.msra.mxu0 %v265
        %611 = vmatprep.subr.mxu0 %v260
        %612 = vmatpush1.msra.mxu0 %v259
        %613 = vmatprep.subr.mxu0 %v254
        %614 = vmatpush1.msra.mxu0 %v253
        %615 = vmatprep.subr.mxu0 %v248
        %616 = vmatpush1.msra.mxu0 %v247
        %617 = vmatprep.subr.mxu0 %v242
        %618 = vmatpush1.msra.mxu0 %v241
        %619 = vmatprep.subr.mxu0 %v236
        %620 = vmatpush1.msra.mxu0 %v235
        %621 = vmatprep.subr.mxu0 %v230
        %622 = vmatpush1.msra.mxu0 %v229
        %623 = vmatprep.subr.mxu0 %v416
        %624 = vmatpush2.msra.mxu0 %v415
        %625 = vmatprep.subr.mxu0 %v410
        %626 = vmatpush2.msra.mxu0 %v409
        %627 = vmatprep.subr.mxu0 %v404
        %628 = vmatpush2.msra.mxu0 %v403
        %629 = vmatprep.subr.mxu0 %v398
        %630 = vmatpush2.msra.mxu0 %v397
        %631 = vmatprep.subr.mxu0 %v392
        %632 = vmatpush2.msra.mxu0 %v391
        %633 = vmatprep.subr.mxu0 %v386
        %634 = vmatpush2.msra.mxu0 %v385
        %635 = vmatprep.subr.mxu0 %v380
        %636 = vmatpush2.msra.mxu0 %v379
        %637 = vmatprep.subr.mxu0 %v374
        %638 = vmatpush2.msra.mxu0 %v373
        %639 = vmatprep.subr.mxu0 %v368
        %640 = vmatpush2.msra.mxu0 %v367
        %641 = vmatprep.subr.mxu0 %v362
        %642 = vmatpush2.msra.mxu0 %v361
        %643 = vmatprep.subr.mxu0 %v356
        %644 = vmatpush2.msra.mxu0 %v355
        %645 = vmatprep.subr.mxu0 %v350
        %646 = vmatpush2.msra.mxu0 %v349
        %647 = vmatprep.subr.mxu0 %v344
        %648 = vmatpush2.msra.mxu0 %v343
        %649 = vmatprep.subr.mxu0 %v338
        %650 = vmatpush2.msra.mxu0 %v337
        %651 = vmatprep.subr.mxu0 %v332
        %652 = vmatpush2.msra.mxu0 %v331
        %653 = vmatprep.subr.mxu0 %v326
        %654 = vmatpush2.msra.mxu0 %v325
        %655 = vmatprep.mubr.f32.mxu0 %v224
        %656 = vmatmul.mubr.f32.gmra.mxu0 %v223
        %v657 = vpop.f32.mrf.mxu0
        %v658 = vadd.f32 %v438, %v657
        %v659 = vpop.f32.mrf.mxu0
        %v660 = vadd.f32 %v442, %v659
        %661 = vdwg.mxu0
        %v662 = vmul.f32 %v516, 0.088388346
        %663 = vmatprep.subr.mxu0 0.0
        %664 = vmatpush1.xpose.msra.mxu0 0.0
        %665 = vmatprep.subr.mxu0 0.0
        %666 = vmatpush1.xpose.msra.mxu0 0.0
        %667 = vmatprep.subr.mxu0 0.0
        %668 = vmatpush1.xpose.msra.mxu0 0.0
        %669 = vmatprep.subr.mxu0 0.0
        %670 = vmatpush1.xpose.msra.mxu0 0.0
        %671 = vmatprep.subr.mxu0 0.0
        %672 = vmatpush1.xpose.msra.mxu0 0.0
        %673 = vmatprep.subr.mxu0 0.0
        %674 = vmatpush1.xpose.msra.mxu0 0.0
        %675 = vmatprep.subr.mxu0 0.0
        %676 = vmatpush1.xpose.msra.mxu0 0.0
        %677 = vmatprep.subr.mxu0 0.0
        %678 = vmatpush1.xpose.msra.mxu0 0.0
        %679 = vmatprep.subr.mxu0 0.0
        %680 = vmatpush1.xpose.msra.mxu0 0.0
        %681 = vmatprep.subr.mxu0 0.0
        %682 = vmatpush1.xpose.msra.mxu0 0.0
        %683 = vmatprep.subr.mxu0 0.0
        %684 = vmatpush1.xpose.msra.mxu0 0.0
        %685 = vmatprep.subr.mxu0 0.0
        %686 = vmatpush1.xpose.msra.mxu0 0.0
        %687 = vmatprep.subr.mxu0 0.0
        %688 = vmatpush1.xpose.msra.mxu0 0.0
        %689 = vmatprep.subr.mxu0 0.0
        %690 = vmatpush1.xpose.msra.mxu0 0.0
        %691 = vmatprep.subr.mxu0 0.0
        %692 = vmatpush1.xpose.msra.mxu0 0.0
        %693 = vmatprep.subr.mxu0 0.0
        %694 = vmatpush1.xpose.msra.mxu0 %v587
        %695 = vmatprep.subr.mxu0 0.0
        %696 = vmatpush2.xpose.msra.mxu0 0.0
        %697 = vmatprep.subr.mxu0 0.0
        %698 = vmatpush2.xpose.msra.mxu0 0.0
        %699 = vmatprep.subr.mxu0 0.0
        %700 = vmatpush2.xpose.msra.mxu0 0.0
        %701 = vmatprep.subr.mxu0 0.0
        %702 = vmatpush2.xpose.msra.mxu0 0.0
        %703 = vmatprep.subr.mxu0 0.0
        %704 = vmatpush2.xpose.msra.mxu0 0.0
        %705 = vmatprep.subr.mxu0 0.0
        %706 = vmatpush2.xpose.msra.mxu0 0.0
        %707 = vmatprep.subr.mxu0 0.0
        %708 = vmatpush2.xpose.msra.mxu0 0.0
        %709 = vmatprep.subr.mxu0 0.0
        %710 = vmatpush2.xpose.msra.mxu0 0.0
        %711 = vmatprep.subr.mxu0 0.0
        %712 = vmatpush2.xpose.msra.mxu0 0.0
        %713 = vmatprep.subr.mxu0 0.0
        %714 = vmatpush2.xpose.msra.mxu0 0.0
        %715 = vmatprep.subr.mxu0 0.0
        %716 = vmatpush2.xpose.msra.mxu0 0.0
        %717 = vmatprep.subr.mxu0 0.0
        %718 = vmatpush2.xpose.msra.mxu0 0.0
        %719 = vmatprep.subr.mxu0 0.0
        %720 = vmatpush2.xpose.msra.mxu0 0.0
        %721 = vmatprep.subr.mxu0 0.0
        %722 = vmatpush2.xpose.msra.mxu0 0.0
        %723 = vmatprep.subr.mxu0 0.0
        %724 = vmatpush2.xpose.msra.mxu0 0.0
        %725 = vmatprep.subr.mxu0 0.0
        %726 = vmatpush2.xpose.msra.mxu0 0.0
        %727 = vmatprep.mubr.f32.mxu0 0.0
        %728 = vmatmul.mubr.f32.gmra.mxu0 %v662
        %v729 = vpop.f32.mrf.mxu0
        %v730 = vadd.f32 0.0, %v729
        %v731 = vpop.f32.mrf.mxu0
        %732 = vdwg.mxu0
        %vm733 = vcmask 64512
        %v734 = vsel %vm733, %v730, -inf
        %735 = vmax.xlane.f32.xlu0 %v734
        %v736 = vpop.xlane.xlu0 %735
        %v737 = vsub.f32 %v730, %v736
        %v738 = vmul.f32 %v737, 1.442695
        %v739 = vpow.pop %v738
        %v740 = vsel %vm733, %v739, 0.0
        %741 = vadd.xlane.f32.xlu0 %v740
        %v742 = vpop.xlane.xlu0 %741
        %v743 = vrcp.pop %v742
        %v744 = vmul.f32 %v739, %v743
        %v746 = vsel %vm733, %v744, 0
        %748 = vmatprep.subr.mxu0 0.0
        %749 = vmatpush1.msra.mxu0 0.0
        %750 = vmatprep.subr.mxu0 0.0
        %751 = vmatpush1.msra.mxu0 0.0
        %752 = vmatprep.subr.mxu0 0.0
        %753 = vmatpush1.msra.mxu0 0.0
        %754 = vmatprep.subr.mxu0 0.0
        %755 = vmatpush1.msra.mxu0 0.0
        %756 = vmatprep.subr.mxu0 0.0
        %757 = vmatpush1.msra.mxu0 0.0
        %758 = vmatprep.subr.mxu0 0.0
        %759 = vmatpush1.msra.mxu0 0.0
        %760 = vmatprep.subr.mxu0 0.0
        %761 = vmatpush1.msra.mxu0 0.0
        %762 = vmatprep.subr.mxu0 0.0
        %763 = vmatpush1.msra.mxu0 0.0
        %764 = vmatprep.subr.mxu0 0.0
        %765 = vmatpush1.msra.mxu0 0.0
        %766 = vmatprep.subr.mxu0 0.0
        %767 = vmatpush1.msra.mxu0 0.0
        %768 = vmatprep.subr.mxu0 0.0
        %769 = vmatpush1.msra.mxu0 0.0
        %770 = vmatprep.subr.mxu0 0.0
        %771 = vmatpush1.msra.mxu0 0.0
        %772 = vmatprep.subr.mxu0 0.0
        %773 = vmatpush1.msra.mxu0 0.0
        %774 = vmatprep.subr.mxu0 0.0
        %775 = vmatpush1.msra.mxu0 0.0
        %776 = vmatprep.subr.mxu0 0.0
        %777 = vmatpush1.msra.mxu0 0.0
        %778 = vmatprep.subr.mxu0 0.0
        %779 = vmatpush1.msra.mxu0 %v658
        %780 = vmatprep.subr.mxu0 0.0
        %781 = vmatpush2.msra.mxu0 0.0
        %782 = vmatprep.subr.mxu0 0.0
        %783 = vmatpush2.msra.mxu0 0.0
        %784 = vmatprep.subr.mxu0 0.0
        %785 = vmatpush2.msra.mxu0 0.0
        %786 = vmatprep.subr.mxu0 0.0
        %787 = vmatpush2.msra.mxu0 0.0
        %788 = vmatprep.subr.mxu0 0.0
        %789 = vmatpush2.msra.mxu0 0.0
        %790 = vmatprep.subr.mxu0 0.0
        %791 = vmatpush2.msra.mxu0 0.0
        %792 = vmatprep.subr.mxu0 0.0
        %793 = vmatpush2.msra.mxu0 0.0
        %794 = vmatprep.subr.mxu0 0.0
        %795 = vmatpush2.msra.mxu0 0.0
        %796 = vmatprep.subr.mxu0 0.0
        %797 = vmatpush2.msra.mxu0 0.0
        %798 = vmatprep.subr.mxu0 0.0
        %799 = vmatpush2.msra.mxu0 0.0
        %800 = vmatprep.subr.mxu0 0.0
        %801 = vmatpush2.msra.mxu0 0.0
        %802 = vmatprep.subr.mxu0 0.0
        %803 = vmatpush2.msra.mxu0 0.0
        %804 = vmatprep.subr.mxu0 0.0
        %805 = vmatpush2.msra.mxu0 0.0
        %806 = vmatprep.subr.mxu0 0.0
        %807 = vmatpush2.msra.mxu0 0.0
        %808 = vmatprep.subr.mxu0 0.0
        %809 = vmatpush2.msra.mxu0 0.0
        %810 = vmatprep.subr.mxu0 0.0
        %811 = vmatpush2.msra.mxu0 0.0
        %812 = vmatprep.mubr.f32.mxu0 0.0
        %813 = vmatmul.mubr.f32.gmra.mxu0 %v746
        %v814 = vpop.f32.mrf.mxu0
        %v815 = vadd.f32 0.0, %v814
        %v816 = vpop.f32.mrf.mxu0
        %817 = vdwg.mxu0
        %v818 = vmul.f32 %v518, 0.088388346
        %819 = vmatprep.subr.mxu0 0.0
        %820 = vmatpush1.xpose.msra.mxu0 0.0
        %821 = vmatprep.subr.mxu0 0.0
        %822 = vmatpush1.xpose.msra.mxu0 0.0
        %823 = vmatprep.subr.mxu0 0.0
        %824 = vmatpush1.xpose.msra.mxu0 0.0
        %825 = vmatprep.subr.mxu0 0.0
        %826 = vmatpush1.xpose.msra.mxu0 0.0
        %827 = vmatprep.subr.mxu0 0.0
        %828 = vmatpush1.xpose.msra.mxu0 0.0
        %829 = vmatprep.subr.mxu0 0.0
        %830 = vmatpush1.xpose.msra.mxu0 0.0
        %831 = vmatprep.subr.mxu0 0.0
        %832 = vmatpush1.xpose.msra.mxu0 0.0
        %833 = vmatprep.subr.mxu0 0.0
        %834 = vmatpush1.xpose.msra.mxu0 0.0
        %835 = vmatprep.subr.mxu0 0.0
        %836 = vmatpush1.xpose.msra.mxu0 0.0
        %837 = vmatprep.subr.mxu0 0.0
        %838 = vmatpush1.xpose.msra.mxu0 0.0
        %839 = vmatprep.subr.mxu0 0.0
        %840 = vmatpush1.xpose.msra.mxu0 0.0
        %841 = vmatprep.subr.mxu0 0.0
        %842 = vmatpush1.xpose.msra.mxu0 0.0
        %843 = vmatprep.subr.mxu0 0.0
        %844 = vmatpush1.xpose.msra.mxu0 0.0
        %845 = vmatprep.subr.mxu0 0.0
        %846 = vmatpush1.xpose.msra.mxu0 0.0
        %847 = vmatprep.subr.mxu0 0.0
        %848 = vmatpush1.xpose.msra.mxu0 0.0
        %849 = vmatprep.subr.mxu0 0.0
        %850 = vmatpush1.xpose.msra.mxu0 %v589
        %851 = vmatprep.subr.mxu0 0.0
        %852 = vmatpush2.xpose.msra.mxu0 0.0
        %853 = vmatprep.subr.mxu0 0.0
        %854 = vmatpush2.xpose.msra.mxu0 0.0
        %855 = vmatprep.subr.mxu0 0.0
        %856 = vmatpush2.xpose.msra.mxu0 0.0
        %857 = vmatprep.subr.mxu0 0.0
        %858 = vmatpush2.xpose.msra.mxu0 0.0
        %859 = vmatprep.subr.mxu0 0.0
        %860 = vmatpush2.xpose.msra.mxu0 0.0
        %861 = vmatprep.subr.mxu0 0.0
        %862 = vmatpush2.xpose.msra.mxu0 0.0
        %863 = vmatprep.subr.mxu0 0.0
        %864 = vmatpush2.xpose.msra.mxu0 0.0
        %865 = vmatprep.subr.mxu0 0.0
        %866 = vmatpush2.xpose.msra.mxu0 0.0
        %867 = vmatprep.subr.mxu0 0.0
        %868 = vmatpush2.xpose.msra.mxu0 0.0
        %869 = vmatprep.subr.mxu0 0.0
        %870 = vmatpush2.xpose.msra.mxu0 0.0
        %871 = vmatprep.subr.mxu0 0.0
        %872 = vmatpush2.xpose.msra.mxu0 0.0
        %873 = vmatprep.subr.mxu0 0.0
        %874 = vmatpush2.xpose.msra.mxu0 0.0
        %875 = vmatprep.subr.mxu0 0.0
        %876 = vmatpush2.xpose.msra.mxu0 0.0
        %877 = vmatprep.subr.mxu0 0.0
        %878 = vmatpush2.xpose.msra.mxu0 0.0
        %879 = vmatprep.subr.mxu0 0.0
        %880 = vmatpush2.xpose.msra.mxu0 0.0
        %881 = vmatprep.subr.mxu0 0.0
        %882 = vmatpush2.xpose.msra.mxu0 0.0
        %883 = vmatprep.mubr.f32.mxu0 0.0
        %884 = vmatmul.mubr.f32.gmra.mxu0 %v818
        %v885 = vpop.f32.mrf.mxu0
        %v886 = vadd.f32 0.0, %v885
        %v887 = vpop.f32.mrf.mxu0
        %888 = vdwg.mxu0
        %v889 = vsel %vm733, %v886, -inf
        %890 = vmax.xlane.f32.xlu0 %v889
        %v891 = vpop.xlane.xlu0 %890
        %v892 = vsub.f32 %v886, %v891
        %v893 = vmul.f32 %v892, 1.442695
        %v894 = vpow.pop %v893
        %v895 = vsel %vm733, %v894, 0.0
        %896 = vadd.xlane.f32.xlu0 %v895
        %v897 = vpop.xlane.xlu0 %896
        %v898 = vrcp.pop %v897
        %v899 = vmul.f32 %v894, %v898
        %v901 = vsel %vm733, %v899, 0
        %903 = vmatprep.subr.mxu0 0.0
        %904 = vmatpush1.msra.mxu0 0.0
        %905 = vmatprep.subr.mxu0 0.0
        %906 = vmatpush1.msra.mxu0 0.0
        %907 = vmatprep.subr.mxu0 0.0
        %908 = vmatpush1.msra.mxu0 0.0
        %909 = vmatprep.subr.mxu0 0.0
        %910 = vmatpush1.msra.mxu0 0.0
        %911 = vmatprep.subr.mxu0 0.0
        %912 = vmatpush1.msra.mxu0 0.0
        %913 = vmatprep.subr.mxu0 0.0
        %914 = vmatpush1.msra.mxu0 0.0
        %915 = vmatprep.subr.mxu0 0.0
        %916 = vmatpush1.msra.mxu0 0.0
        %917 = vmatprep.subr.mxu0 0.0
        %918 = vmatpush1.msra.mxu0 0.0
        %919 = vmatprep.subr.mxu0 0.0
        %920 = vmatpush1.msra.mxu0 0.0
        %921 = vmatprep.subr.mxu0 0.0
        %922 = vmatpush1.msra.mxu0 0.0
        %923 = vmatprep.subr.mxu0 0.0
        %924 = vmatpush1.msra.mxu0 0.0
        %925 = vmatprep.subr.mxu0 0.0
        %926 = vmatpush1.msra.mxu0 0.0
        %927 = vmatprep.subr.mxu0 0.0
        %928 = vmatpush1.msra.mxu0 0.0
        %929 = vmatprep.subr.mxu0 0.0
        %930 = vmatpush1.msra.mxu0 0.0
        %931 = vmatprep.subr.mxu0 0.0
        %932 = vmatpush1.msra.mxu0 0.0
        %933 = vmatprep.subr.mxu0 0.0
        %934 = vmatpush1.msra.mxu0 %v660
        %935 = vmatprep.subr.mxu0 0.0
        %936 = vmatpush2.msra.mxu0 0.0
        %937 = vmatprep.subr.mxu0 0.0
        %938 = vmatpush2.msra.mxu0 0.0
        %939 = vmatprep.subr.mxu0 0.0
        %940 = vmatpush2.msra.mxu0 0.0
        %941 = vmatprep.subr.mxu0 0.0
        %942 = vmatpush2.msra.mxu0 0.0
        %943 = vmatprep.subr.mxu0 0.0
        %944 = vmatpush2.msra.mxu0 0.0
        %945 = vmatprep.subr.mxu0 0.0
        %946 = vmatpush2.msra.mxu0 0.0
        %947 = vmatprep.subr.mxu0 0.0
        %948 = vmatpush2.msra.mxu0 0.0
        %949 = vmatprep.subr.mxu0 0.0
        %950 = vmatpush2.msra.mxu0 0.0
        %951 = vmatprep.subr.mxu0 0.0
        %952 = vmatpush2.msra.mxu0 0.0
        %953 = vmatprep.subr.mxu0 0.0
        %954 = vmatpush2.msra.mxu0 0.0
        %955 = vmatprep.subr.mxu0 0.0
        %956 = vmatpush2.msra.mxu0 0.0
        %957 = vmatprep.subr.mxu0 0.0
        %958 = vmatpush2.msra.mxu0 0.0
        %959 = vmatprep.subr.mxu0 0.0
        %960 = vmatpush2.msra.mxu0 0.0
        %961 = vmatprep.subr.mxu0 0.0
        %962 = vmatpush2.msra.mxu0 0.0
        %963 = vmatprep.subr.mxu0 0.0
        %964 = vmatpush2.msra.mxu0 0.0
        %965 = vmatprep.subr.mxu0 0.0
        %966 = vmatpush2.msra.mxu0 0.0
        %967 = vmatprep.mubr.f32.mxu0 0.0
        %968 = vmatmul.mubr.f32.gmra.mxu0 %v901
        %v969 = vpop.f32.mrf.mxu0
        %v970 = vadd.f32 0.0, %v969
        %v971 = vpop.f32.mrf.mxu0
        %972 = vdwg.mxu0
        %v973 = vld [vmem:[%s3] sm:$0xff]
        %v974 = vld [vmem:[%s3 + $0x8] sm:$0xff]
        %v975 = vld [vmem:[%s3 + $0x10] sm:$0xff]
        %v976 = vld [vmem:[%s3 + $0x18] sm:$0xff]
        %v977 = vld [vmem:[%s3 + $0x20] sm:$0xff]
        %v978 = vld [vmem:[%s3 + $0x28] sm:$0xff]
        %v979 = vld [vmem:[%s3 + $0x30] sm:$0xff]
        %v980 = vld [vmem:[%s3 + $0x38] sm:$0xff]
        %v981 = vld [vmem:[%s3 + $0x40] sm:$0xff]
        %v982 = vld [vmem:[%s3 + $0x48] sm:$0xff]
        %v983 = vld [vmem:[%s3 + $0x50] sm:$0xff]
        %v984 = vld [vmem:[%s3 + $0x58] sm:$0xff]
        %v985 = vld [vmem:[%s3 + $0x60] sm:$0xff]
        %v986 = vld [vmem:[%s3 + $0x68] sm:$0xff]
        %v987 = vld [vmem:[%s3 + $0x70] sm:$0xff]
        %v988 = vld [vmem:[%s3 + $0x78] sm:$0xff]
        %v989 = vld [vmem:[%s3 + $0x80] sm:$0xff]
        %v990 = vld [vmem:[%s3 + $0x88] sm:$0xff]
        %v991 = vld [vmem:[%s3 + $0x90] sm:$0xff]
        %v992 = vld [vmem:[%s3 + $0x98] sm:$0xff]
        %v993 = vld [vmem:[%s3 + $0xa0] sm:$0xff]
        %v994 = vld [vmem:[%s3 + $0xa8] sm:$0xff]
        %v995 = vld [vmem:[%s3 + $0xb0] sm:$0xff]
        %v996 = vld [vmem:[%s3 + $0xb8] sm:$0xff]
        %v997 = vld [vmem:[%s3 + $0xc0] sm:$0xff]
        %v998 = vld [vmem:[%s3 + $0xc8] sm:$0xff]
        %v999 = vld [vmem:[%s3 + $0xd0] sm:$0xff]
        %v1000 = vld [vmem:[%s3 + $0xd8] sm:$0xff]
        %v1001 = vld [vmem:[%s3 + $0xe0] sm:$0xff]
        %v1002 = vld [vmem:[%s3 + $0xe8] sm:$0xff]
        %v1003 = vld [vmem:[%s3 + $0xf0] sm:$0xff]
        %v1004 = vld [vmem:[%s3 + $0xf8] sm:$0xff]
        %v1005 = vld [vmem:[%s3 + $0x100] sm:$0xff]
        %v1006 = vld [vmem:[%s3 + $0x108] sm:$0xff]
        %v1007 = vld [vmem:[%s3 + $0x110] sm:$0xff]
        %v1008 = vld [vmem:[%s3 + $0x118] sm:$0xff]
        %v1009 = vld [vmem:[%s3 + $0x120] sm:$0xff]
        %v1010 = vld [vmem:[%s3 + $0x128] sm:$0xff]
        %v1011 = vld [vmem:[%s3 + $0x130] sm:$0xff]
        %v1012 = vld [vmem:[%s3 + $0x138] sm:$0xff]
        %v1013 = vld [vmem:[%s3 + $0x140] sm:$0xff]
        %v1014 = vld [vmem:[%s3 + $0x148] sm:$0xff]
        %v1015 = vld [vmem:[%s3 + $0x150] sm:$0xff]
        %v1016 = vld [vmem:[%s3 + $0x158] sm:$0xff]
        %v1017 = vld [vmem:[%s3 + $0x160] sm:$0xff]
        %v1018 = vld [vmem:[%s3 + $0x168] sm:$0xff]
        %v1019 = vld [vmem:[%s3 + $0x170] sm:$0xff]
        %v1020 = vld [vmem:[%s3 + $0x178] sm:$0xff]
        %v1021 = vld [vmem:[%s3 + $0x180] sm:$0xff]
        %v1022 = vld [vmem:[%s3 + $0x188] sm:$0xff]
        %v1023 = vld [vmem:[%s3 + $0x190] sm:$0xff]
        %v1024 = vld [vmem:[%s3 + $0x198] sm:$0xff]
        %v1025 = vld [vmem:[%s3 + $0x1a0] sm:$0xff]
        %v1026 = vld [vmem:[%s3 + $0x1a8] sm:$0xff]
        %v1027 = vld [vmem:[%s3 + $0x1b0] sm:$0xff]
        %v1028 = vld [vmem:[%s3 + $0x1b8] sm:$0xff]
        %v1029 = vld [vmem:[%s3 + $0x1c0] sm:$0xff]
        %v1030 = vld [vmem:[%s3 + $0x1c8] sm:$0xff]
        %v1031 = vld [vmem:[%s3 + $0x1d0] sm:$0xff]
        %v1032 = vld [vmem:[%s3 + $0x1d8] sm:$0xff]
        %v1033 = vld [vmem:[%s3 + $0x1e0] sm:$0xff]
        %v1034 = vld [vmem:[%s3 + $0x1e8] sm:$0xff]
        %v1035 = vld [vmem:[%s3 + $0x1f0] sm:$0xff]
        %v1036 = vld [vmem:[%s3 + $0x1f8] sm:$0xff]
        %v1037 = vld [vmem:[%s4] sm:$0x3]
        %v1039 = vlaneseq
        %v1040 = vshrl.u32 %v1039, 7
        %v1041 = vsub.s32 0, %v1040
        %v1042 = vrot.slane %v1037, %v1041
        %v1043 = vlaneseq
        %v1044 = vshrl.u32 %v1043, 7
        %v1045 = vsub.s32 1, %v1044
        %v1046 = vrot.slane %v1037, %v1045
        %1049 = vmatprep.subr.mxu0 %v1004
        %1050 = vmatpush1.msra.mxu0 %v1003
        %1051 = vmatprep.subr.mxu0 %v1002
        %1052 = vmatpush1.msra.mxu0 %v1001
        %1053 = vmatprep.subr.mxu0 %v1000
        %1054 = vmatpush1.msra.mxu0 %v999
        %1055 = vmatprep.subr.mxu0 %v998
        %1056 = vmatpush1.msra.mxu0 %v997
        %1057 = vmatprep.subr.mxu0 %v996
        %1058 = vmatpush1.msra.mxu0 %v995
        %1059 = vmatprep.subr.mxu0 %v994
        %1060 = vmatpush1.msra.mxu0 %v993
        %1061 = vmatprep.subr.mxu0 %v992
        %1062 = vmatpush1.msra.mxu0 %v991
        %1063 = vmatprep.subr.mxu0 %v990
        %1064 = vmatpush1.msra.mxu0 %v989
        %1065 = vmatprep.subr.mxu0 %v988
        %1066 = vmatpush1.msra.mxu0 %v987
        %1067 = vmatprep.subr.mxu0 %v986
        %1068 = vmatpush1.msra.mxu0 %v985
        %1069 = vmatprep.subr.mxu0 %v984
        %1070 = vmatpush1.msra.mxu0 %v983
        %1071 = vmatprep.subr.mxu0 %v982
        %1072 = vmatpush1.msra.mxu0 %v981
        %1073 = vmatprep.subr.mxu0 %v980
        %1074 = vmatpush1.msra.mxu0 %v979
        %1075 = vmatprep.subr.mxu0 %v978
        %1076 = vmatpush1.msra.mxu0 %v977
        %1077 = vmatprep.subr.mxu0 %v976
        %1078 = vmatpush1.msra.mxu0 %v975
        %1079 = vmatprep.subr.mxu0 %v974
        %1080 = vmatpush1.msra.mxu0 %v973
        %1081 = vmatprep.subr.mxu0 %v1036
        %1082 = vmatpush2.msra.mxu0 %v1035
        %1083 = vmatprep.subr.mxu0 %v1034
        %1084 = vmatpush2.msra.mxu0 %v1033
        %1085 = vmatprep.subr.mxu0 %v1032
        %1086 = vmatpush2.msra.mxu0 %v1031
        %1087 = vmatprep.subr.mxu0 %v1030
        %1088 = vmatpush2.msra.mxu0 %v1029
        %1089 = vmatprep.subr.mxu0 %v1028
        %1090 = vmatpush2.msra.mxu0 %v1027
        %1091 = vmatprep.subr.mxu0 %v1026
        %1092 = vmatpush2.msra.mxu0 %v1025
        %1093 = vmatprep.subr.mxu0 %v1024
        %1094 = vmatpush2.msra.mxu0 %v1023
        %1095 = vmatprep.subr.mxu0 %v1022
        %1096 = vmatpush2.msra.mxu0 %v1021
        %1097 = vmatprep.subr.mxu0 %v1020
        %1098 = vmatpush2.msra.mxu0 %v1019
        %1099 = vmatprep.subr.mxu0 %v1018
        %1100 = vmatpush2.msra.mxu0 %v1017
        %1101 = vmatprep.subr.mxu0 %v1016
        %1102 = vmatpush2.msra.mxu0 %v1015
        %1103 = vmatprep.subr.mxu0 %v1014
        %1104 = vmatpush2.msra.mxu0 %v1013
        %1105 = vmatprep.subr.mxu0 %v1012
        %1106 = vmatpush2.msra.mxu0 %v1011
        %1107 = vmatprep.subr.mxu0 %v1010
        %1108 = vmatpush2.msra.mxu0 %v1009
        %1109 = vmatprep.subr.mxu0 %v1008
        %1110 = vmatpush2.msra.mxu0 %v1007
        %1111 = vmatprep.subr.mxu0 %v1006
        %1112 = vmatpush2.msra.mxu0 %v1005
        %1113 = vmatprep.mubr.f32.mxu0 %v970
        %1114 = vmatmul.mubr.f32.gmra.mxu0 %v815
        %v1115 = vpop.f32.mrf.mxu0
        %v1116 = vadd.f32 %v1042, %v1115
        %v1117 = vpop.f32.mrf.mxu0
        %v1118 = vadd.f32 %v1046, %v1117
        %1119 = vdwg.mxu0
        %1120 = vst [vmem:[%s217] sm:$0xff] %v1116
        %1121 = vst [vmem:[%s217 + $0x8] sm:$0xff] %v1118
        %s1122 = sand.u32 %s137, 1
        %s1123 = scalar_lea.sflag [#allocation3], %s1122
        %s1124 = sand.u32 %s137, 1
        %s1125 = smul.addr %s1124, 16
        %s1126 = scalar_lea.vmem [#allocation2], %s1125
        // Predicated region
        $region41: #{tnt_attention.1} parent=39 // pred_check
          %p1127 = pneg %p147
        $region42: #{tnt_attention.1} parent=39 // pred_check_branch
          %1129 = sbr.rel (%p1127) target = $region44
        $region43: #{tnt_attention.1} parent=39 // pred_region
          %s1131 = ssub.s32 256, 256
          %1132 = vsyncadd %s1123, %s1131
          %s1133 = smul.addr %s19, 2
          %s1134 = smul.addr %s1133, 128
          %s1135 = scalar_lea.hbm %s5, %s1134
          %s1137 = sshll.u32 %s1126, 4
          %s1138 = int_to_ptr.vmem [resolvable:$true] %s1137
          %1140 = dma.vmem_to_hbm [thread:$0]  %s1138, 256, %s1135, %s1123
        $region44: #{tnt_attention.1} parent=39 // pred_fallthru
          _
      $region40: #{tnt_attention.1} parent=5 // pred_fallthru
        _
      %p1141 = scmp.le.s32.totalorder 2, %s14
      // Predicated region
      $region45: #{tnt_attention.1} parent=5 // pred_check
        %p1142 = pneg %p1141
      $region46: #{tnt_attention.1} parent=5 // pred_check_branch
        %1144 = sbr.rel (%p1142) target = $region48
      $region47: #{tnt_attention.1} parent=5 // pred_region
        %s1145 = ssub.s32 %s14, 2
        // Predicated region
        $region49: #{tnt_attention.1} parent=47 // pred_check
          %p1146 = pneg %p153
        $region50: #{tnt_attention.1} parent=47 // pred_check_branch
          %1148 = sbr.rel (%p1146) target = $region52
        $region51: #{tnt_attention.1} parent=47 // pred_region
          %s1149 = sand.u32 %s138, 1
          %s1150 = scalar_lea.sflag [#allocation3], %s1149
          %s1151 = sand.u32 %s138, 1
          %s1152 = smul.addr %s1151, 16
          %s1153 = scalar_lea.vmem [#allocation2], %s1152
          %1154 = dma.done %s1150, 256
        $region52: #{tnt_attention.1} parent=47 // pred_fallthru
          _
      $region48: #{tnt_attention.1} parent=5 // pred_fallthru
        _
    $region6: #{tnt_attention.1} parent=1 // loop_footer
      %s18 = sadd.s32 1, %s14
    $region7: #{tnt_attention.1} parent=1 // loop_footer_branch
      %13 = sbr.rel target = $region3
    $region8: #{tnt_attention.1} parent=1 // loop_exit
      _
    %1155 = vsyncpa [#allocation3], 1
    %s1156 = scalar_lea.sflag [#allocation3], 1
    %1157 = vsyncpa %s1156, 1

</llo_original>
